<compile_context>
chip_gen: v5e
topology: v5e:2x2
jax: 0.10.0
libtpu: 0.0.40
codegen_flags: <defaults>
</compile_context>

<pallas_src>
import jax
import jax.numpy as jnp
from jax.experimental import pallas as pl
from jax.experimental.pallas import tpu as pltpu


def _round_up(a: int, b: int) -> int:
    return (a + b - 1) // b * b


# ---------- fused kernel: out[i] = (sum_k adj[i,k] @ x[k]) @ W.T ------------
def _agg_then_project_kernel(x_ref, wT_ref, adj_ref, o_ref, acc_ref):
    k = pl.program_id(1)

    @pl.when(k == 0)
    def _():
        acc_ref[...] = jnp.zeros_like(acc_ref)

    # Aggregate this neighbor block in Cin space (MXU, f32 accumulation).
    acc_ref[...] += jnp.dot(adj_ref[...], x_ref[...],
                            preferred_element_type=jnp.float32)

    @pl.when(k == pl.num_programs(1) - 1)
    def _():
        # Apply the projection exactly once per output row tile.
        o_ref[...] = jnp.dot(acc_ref[...], wT_ref[...],
                             preferred_element_type=jnp.float32).astype(o_ref.dtype)


# ---------- projection kernel: h[i] = x[i] @ W.T ----------------------------
def _project_kernel(x_ref, wT_ref, o_ref):
    o_ref[...] = jnp.dot(x_ref[...], wT_ref[...],
                         preferred_element_type=jnp.float32).astype(o_ref.dtype)


# ---------- aggregation kernel: out[i] = sum_k adj[i,k] @ h[k] --------------
def _aggregate_kernel(h_ref, adj_ref, o_ref, acc_ref):
    k = pl.program_id(1)

    @pl.when(k == 0)
    def _():
        acc_ref[...] = jnp.zeros_like(acc_ref)

    acc_ref[...] += jnp.dot(adj_ref[...], h_ref[...],
                            preferred_element_type=jnp.float32)

    @pl.when(k == pl.num_programs(1) - 1)
    def _():
        o_ref[...] = acc_ref[...].astype(o_ref.dtype)


def vanilla_gnn_layer(x, weight, adjacency, *, tm=256, tk=512):
    """x: [N, Cin], weight: [Cout, Cin] (PyTorch layout), adjacency: [N, N] dense."""
    N, Cin = x.shape
    Cout, Cin_w = weight.shape
    assert Cin_w == Cin
    assert adjacency.shape == (N, N)

    # Lane-dense feature dims (multiples of 128) -> unmasked vector stores and
    # full MXU utilization on the N-dim of both matmuls.
    cin_p = _round_up(Cin, 128)
    cout_p = _round_up(Cout, 128)

    # Clamp tiles for small problems, keep (8, 128) divisibility.
    tm = min(tm, _round_up(N, 8))
    tk = min(tk, _round_up(N, 128))
    n_rows = _round_up(N, tm)   # padded row extent of adjacency / output
    n_cols = _round_up(N, tk)   # padded col extent of adjacency / rows of x

    # Zero-padding is exact: padded adjacency cols x padded feature rows
    # contribute zero, padded feature columns contribute zero, padded output
    # rows/cols are sliced off below.
    x_p = jnp.zeros((n_cols, cin_p), x.dtype).at[:N, :Cin].set(x)
    w_t = jnp.zeros((cin_p, cout_p), weight.dtype).at[:Cin, :Cout].set(weight.T)
    adj_p = jnp.zeros((n_rows, n_cols), adjacency.dtype).at[:N, :N].set(adjacency)

    grid = (n_rows // tm, n_cols // tk)

    cost = pl.CostEstimate(
        flops=2 * N * Cin * Cout + 2 * N * N * min(Cin, Cout),
        transcendentals=0,
        bytes_accessed=4 * (N * N + N * Cin + Cin * Cout + N * Cout),
    )

    agg_params = pltpu.CompilerParams(
        dimension_semantics=("parallel", "arbitrary"),
        # Explicit budget; default tiles (256x512 adj f32 + feat + W_T + acc,
        # double-buffered) use ~2-3 MiB, well under 64 MiB-physical v7x.
        vmem_limit_bytes=48 * 1024 * 1024,
    )

    if cin_p <= cout_p:
        # Aggregate in Cin space, project once per row tile in the epilogue.
        out = pl.pallas_call(
            _agg_then_project_kernel,
            out_shape=jax.ShapeDtypeStruct((n_rows, cout_p), x.dtype),
            grid_spec=pltpu.PrefetchScalarGridSpec(
                num_scalar_prefetch=0,
                grid=grid,
                in_specs=[
                    # x[k] block: depends only on the reduction index.
                    pl.BlockSpec((tk, cin_p), lambda i, k: (k, 0)),
                    # W_T: fully resident (small).
                    pl.BlockSpec((cin_p, cout_p), lambda i, k: (0, 0)),
                    # adjacency tile: the dominant HBM stream.
                    pl.BlockSpec((tm, tk), lambda i, k: (i, k)),
                ],
                # Output block index constant along k -> resident row tile.
                out_specs=pl.BlockSpec((tm, cout_p), lambda i, k: (i, 0)),
                scratch_shapes=[pltpu.VMEM((tm, cin_p), jnp.float32)],
            ),
            compiler_params=agg_params,
            cost_estimate=cost,
        )(x_p, w_t, adj_p)
    else:
        # Cout < Cin: project first so the O(N^2) aggregation runs in Cout space.
        h = pl.pallas_call(
            _project_kernel,
            out_shape=jax.ShapeDtypeStruct((n_cols, cout_p), x.dtype),
            grid_spec=pltpu.PrefetchScalarGridSpec(
                num_scalar_prefetch=0,
                grid=(n_cols // tk,),
                in_specs=[
                    pl.BlockSpec((tk, cin_p), lambda i: (i, 0)),
                    pl.BlockSpec((cin_p, cout_p), lambda i: (0, 0)),
                ],
                out_specs=pl.BlockSpec((tk, cout_p), lambda i: (i, 0)),
            ),
            compiler_params=pltpu.CompilerParams(
                dimension_semantics=("parallel",),
                vmem_limit_bytes=48 * 1024 * 1024,
            ),
        )(x_p, w_t)

        out = pl.pallas_call(
            _aggregate_kernel,
            out_shape=jax.ShapeDtypeStruct((n_rows, cout_p), x.dtype),
            grid_spec=pltpu.PrefetchScalarGridSpec(
                num_scalar_prefetch=0,
                grid=grid,
                in_specs=[
                    pl.BlockSpec((tk, cout_p), lambda i, k: (k, 0)),
                    pl.BlockSpec((tm, tk), lambda i, k: (i, k)),
                ],
                out_specs=pl.BlockSpec((tm, cout_p), lambda i, k: (i, 0)),
                scratch_shapes=[pltpu.VMEM((tm, cout_p), jnp.float32)],
            ),
            compiler_params=agg_params,
            cost_estimate=cost,
        )(h, adj_p)

    return out[:N, :Cout]


def _make_inputs(key, n, cin, cout):
    k_x, k_w, k_a = jax.random.split(key, 3)
    x = jax.random.normal(k_x, (n, cin), dtype=jnp.float32)
    # Deterministic init matching nn.Linear's uniform(-1/sqrt(in), 1/sqrt(in)).
    bound = 1.0 / (cin ** 0.5)
    weight = jax.random.uniform(k_w, (cout, cin), dtype=jnp.float32,
                                minval=-bound, maxval=bound)
    # Dense adjacency with self-loops.
    # TODO(synk): sparse (CSR/COO) adjacency storage has no clean Pallas
    # equivalent here; adjacency is treated as a dense [N, N] matrix.
    adj = (jax.random.uniform(k_a, (n, n), dtype=jnp.float32) < 0.3).astype(
        jnp.float32)
    adj = jnp.minimum(adj + jnp.eye(n, dtype=jnp.float32), 1.0)
    return x, weight, adj


if __name__ == "__main__":
    key = jax.random.PRNGKey(0)
    k1, k2 = jax.random.split(key)

    # Case 1: Cin <= Cout -> fused aggregate-then-project path, grid (3, 3).
    x, weight, adj = _make_inputs(k1, 384, 32, 64)
    out = jax.block_until_ready(vanilla_gnn_layer(x, weight, adj, tm=128, tk=128))
    ref = adj @ (x @ weight.T)
    assert out.shape == (384, 64)
    assert jnp.allclose(out, ref, atol=1e-2, rtol=1e-2), (
        float(jnp.max(jnp.abs(out - ref))))

    # Case 2: Cout < Cin (after padding) -> project-first path, grid (2, 2).
    x2, weight2, adj2 = _make_inputs(k2, 256, 192, 64)
    out2 = jax.block_until_ready(vanilla_gnn_layer(x2, weight2, adj2, tm=128, tk=128))
    ref2 = adj2 @ (x2 @ weight2.T)
    assert out2.shape == (256, 64)
    assert jnp.allclose(out2, ref2, atol=1e-2, rtol=1e-2), (
        float(jnp.max(jnp.abs(out2 - ref2))))

    print("KERNEL_OK")
</pallas_src>

<mosaic_0001>
module attributes {stable_mosaic.version = 11 : i64} {
  func.func @_agg_then_project_kernel(%arg0: i32, %arg1: i32, %arg2: memref<128x128xf32, #tpu.memory_space<vmem>>, %arg3: memref<128x128xf32, #tpu.memory_space<vmem>>, %arg4: memref<128x128xf32, #tpu.memory_space<vmem>>, %arg5: memref<128x128xf32, #tpu.memory_space<vmem>>, %arg6: memref<128x128xf32, #tpu.memory_space<vmem>>) attributes {dimension_semantics = [#tpu.dimension_semantics<parallel>, #tpu.dimension_semantics<arbitrary>], iteration_bounds = array<i64: 3, 3>, scalar_prefetch = 0 : i64, scratch_operands = 1 : i64, tpu.core_type = #tpu.core_type<tc>, window_params = [{transform_indices = @transform_0, window_bounds = array<i64: 128, 128>}, {pipeline_mode = #tpu.pipeline_mode<synchronous>, transform_indices = @transform_1, window_bounds = array<i64: 128, 128>}, {transform_indices = @transform_2, window_bounds = array<i64: 128, 128>}, {transform_indices = @transform_3, window_bounds = array<i64: 128, 128>}]} {
    %c0_i32 = arith.constant 0 : i32
    %0 = arith.cmpi eq, %arg1, %c0_i32 : i32
    %1 = arith.extui %0 : i1 to i32
    %c0_i32_0 = arith.constant 0 : i32
    %2 = arith.cmpi ne, %1, %c0_i32_0 : i32
    scf.if %2 {
      %cst_9 = arith.constant 0.000000e+00 : f32
      %12 = vector.broadcast %cst_9 : f32 to vector<128x128xf32>
      %c0_10 = arith.constant 0 : index
      %c0_11 = arith.constant 0 : index
      %13 = vector.load %arg6[%c0_10, %c0_11] : memref<128x128xf32, #tpu.memory_space<vmem>>, vector<128x128xf32>
      tpu.vector_store %arg6[%c0_10, %c0_11], %12 {strides = array<i32>} : memref<128x128xf32, #tpu.memory_space<vmem>>, vector<128x128xf32>,
    } else {
    }
    %c0 = arith.constant 0 : index
    %c0_1 = arith.constant 0 : index
    %3 = vector.load %arg6[%c0, %c0_1] : memref<128x128xf32, #tpu.memory_space<vmem>>, vector<128x128xf32>
    %c0_2 = arith.constant 0 : index
    %c0_3 = arith.constant 0 : index
    %4 = vector.load %arg4[%c0_2, %c0_3] : memref<128x128xf32, #tpu.memory_space<vmem>>, vector<128x128xf32>
    %c0_4 = arith.constant 0 : index
    %c0_5 = arith.constant 0 : index
    %5 = vector.load %arg2[%c0_4, %c0_5] : memref<128x128xf32, #tpu.memory_space<vmem>>, vector<128x128xf32>
    %cst = arith.constant dense<0.000000e+00> : vector<128x128xf32>
    %6 = tpu.matmul %4, %5, %cst {dimension_numbers = #tpu.dot_dimension_numbers<[1], [0], [0], [1], [0, 0, 1, 1], [], []>} : vector<128x128xf32>, vector<128x128xf32>, vector<128x128xf32> -> vector<128x128xf32>
    %7 = arith.addf %3, %6 : vector<128x128xf32>
    %c0_6 = arith.constant 0 : index
    %c0_7 = arith.constant 0 : index
    %8 = vector.load %arg6[%c0_6, %c0_7] : memref<128x128xf32, #tpu.memory_space<vmem>>, vector<128x128xf32>
    tpu.vector_store %arg6[%c0_6, %c0_7], %7 {strides = array<i32>} : memref<128x128xf32, #tpu.memory_space<vmem>>, vector<128x128xf32>,
    %c2_i32 = arith.constant 2 : i32
    %9 = arith.cmpi eq, %arg1, %c2_i32 : i32
    %10 = arith.extui %9 : i1 to i32
    %c0_i32_8 = arith.constant 0 : i32
    %11 = arith.cmpi ne, %10, %c0_i32_8 : i32
    scf.if %11 {
      %c0_9 = arith.constant 0 : index
      %c0_10 = arith.constant 0 : index
      %12 = vector.load %arg6[%c0_9, %c0_10] : memref<128x128xf32, #tpu.memory_space<vmem>>, vector<128x128xf32>
      %c0_11 = arith.constant 0 : index
      %c0_12 = arith.constant 0 : index
      %13 = vector.load %arg3[%c0_11, %c0_12] : memref<128x128xf32, #tpu.memory_space<vmem>>, vector<128x128xf32>
      %cst_13 = arith.constant dense<0.000000e+00> : vector<128x128xf32>
      %14 = tpu.matmul %12, %13, %cst_13 {dimension_numbers = #tpu.dot_dimension_numbers<[1], [0], [0], [1], [0, 0, 1, 1], [], []>} : vector<128x128xf32>, vector<128x128xf32>, vector<128x128xf32> -> vector<128x128xf32>
      %c0_14 = arith.constant 0 : index
      %c0_15 = arith.constant 0 : index
      %15 = vector.load %arg5[%c0_14, %c0_15] : memref<128x128xf32, #tpu.memory_space<vmem>>, vector<128x128xf32>
      tpu.vector_store %arg5[%c0_14, %c0_15], %14 {strides = array<i32>} : memref<128x128xf32, #tpu.memory_space<vmem>>, vector<128x128xf32>,
    } else {
    }
    return
  }
  func.func @transform_0(%arg0: i32, %arg1: i32) -> (i32, i32) {
    %c0_i32 = arith.constant 0 : i32
    %c0_i32_0 = arith.constant 0 : i32
    return %arg1, %c0_i32 : i32, i32
  }
  func.func @transform_1(%arg0: i32, %arg1: i32) -> (i32, i32) {
    %c0_i32 = arith.constant 0 : i32
    %c0_i32_0 = arith.constant 0 : i32
    %c0_i32_1 = arith.constant 0 : i32
    return %c0_i32, %c0_i32_0 : i32, i32
  }
  func.func @transform_2(%arg0: i32, %arg1: i32) -> (i32, i32) {
    %c0_i32 = arith.constant 0 : i32
    return %arg0, %arg1 : i32, i32
  }
  func.func @transform_3(%arg0: i32, %arg1: i32) -> (i32, i32) {
    %c0_i32 = arith.constant 0 : i32
    %c0_i32_0 = arith.constant 0 : i32
    return %arg0, %c0_i32 : i32, i32
  }
}

</mosaic_0001>

<llo_original>
// kernel: tpu_custom_call.1
$region0: #{tpu_custom_call.1}
  #allocation0 [shape = 'u32[]', space=smem, size = 0x4, offset = 0x4, fixed_abs, tag = 'smem constant byte address 0x4 - core index']
  #allocation1 [shape = 'u32[72,128]{1,0:T(1,128)}', space=vmem, size = 0x9000, scoped, tag = 'internal scratch']
  #allocation2 [shape = 'f32[128,128]{1,0:T(8,128)}', space=vmem, size = 0x10000, scoped, tag = 'scratch operand']
  %s0 = inlined_call_operand.hbm [shape: f32[384,128], index: 0, kind: input, shape index: {}]
  %s1 = inlined_call_operand.hbm [shape: f32[128,128], index: 1, kind: input, shape index: {}]
  %s2 = inlined_call_operand.hbm [shape: f32[384,384], index: 2, kind: input, shape index: {}]
  %s3 = inlined_call_operand.hbm [shape: f32[384,128], index: 3, kind: output, shape index: {}]
  %s4 = sld [smem:[#allocation0]]
  $region65: #{tpu_custom_call.1} parent=0
    _
  %s6 = ssub.s32 1, %s4
  %s7 = scalar_select 0, %s6, %s4
  $region1: #{tpu_custom_call.1} parent=0
    #allocation3 [shape = 'u8[131072]{0}', space=vmem, size = 0x20000, scoped, tag = 'input window, operand 0']
    #allocation4 [shape = 's32[2]{0}', space=sflag, size = 0x8, scoped, tag = 'scoped memory for tpu_custom_call.1']
    #allocation5 [shape = 's32[2]{0}', space=sflag, size = 0x8, scoped, tag = 'scoped memory for tpu_custom_call.1']
    #allocation6 [shape = 'u8[65536]{0}', space=vmem, size = 0x10000, scoped, tag = 'input window, operand 1, single buffered']
    #allocation7 [shape = 's32[1]{0}', space=sflag, size = 0x4, scoped, tag = 'scoped memory for tpu_custom_call.1']
    #allocation8 [shape = 'u8[131072]{0}', space=vmem, size = 0x20000, scoped, tag = 'input window, operand 2']
    #allocation9 [shape = 'u8[131072]{0}', space=vmem, size = 0x20000, scoped, tag = 'output window, operand 0']
    %8 = vsyncpa [#allocation4], 0
    %s9 = scalar_lea.sflag [#allocation4], 1
    %10 = vsyncpa %s9, 0
    %11 = vsyncpa [#allocation7], 0
    %12 = vsyncpa [#allocation5], 0
    %s13 = scalar_lea.sflag [#allocation5], 1
    %14 = vsyncpa %s13, 0
    loop: start=0, step=1, limit=11
    $region2: #{tpu_custom_call.1} parent=1 // loop_pre_header
      _
    $region3: #{tpu_custom_call.1} parent=1 // loop_header
      %s16 = sphi 0, %s20
      %p17 = scmp.ge.s32.totalorder %s16, 11
      %s23 = sphi 0, %s35
      %s24 = sphi 0, %s31
      %s25 = sphi 0, %s23
      %s26 = sphi 0, %s24
      %s27 = sphi 0, %s25
      %s28 = sphi 0, %s26
      %s38 = sphi 0, %s40
      %s41 = sphi 0, %s38
      %s42 = sphi 0, %s41
      %s58 = sphi 0, %s42
      %s62 = sphi 0, %s62
      %s64 = sphi 0, %s62
      %s65 = sphi 0, %s64
      %s79 = sphi 0, %s65
      %s87 = sphi 0, %s89
      %s90 = sphi 0, %s87
      %s91 = sphi 0, %s90
      %s107 = sphi 0, %s91
      %s113 = sphi 0, %s115
      %s116 = sphi 0, %s113
      %s117 = sphi 0, %s116
      %s133 = sphi 0, %s117
    $region4: #{tpu_custom_call.1} parent=1 // loop_header_branch
      %19 = sbr.rel (%p17) target = $region8
    $region5: #{tpu_custom_call.1} parent=1 // loop_body
      %s21 = ssub.s32 %s16, 1
      %s22 = ssub.s32 %s16, 2
      %s29 = sadd.s32 1, %s24
      %p30 = scmp.ge.s32.totalorder %s29, 3
      %s31 = scalar_select %p30, 0, %s29
      %s32 = sadd.s32 1, %s23
      %s33 = scalar_select %p30, %s32, %s23
      %p34 = scmp.ge.s32.totalorder %s33, 3
      %s35 = scalar_select %p34, 0, %s33
      %s36 = ssub.s32 %s24, %s31
      %p37 = scmp.eq.s32.totalorder %s36, 0
      %s39 = sadd.s32 %s38, 1
      %s40 = scalar_select %p37, %s38, %s39
      %p43 = pneg %p37
      %p44 = scmp.eq.s32.totalorder %s16, 8
      %p45 = por %p43, %p44
      %p46 = scmp.ne.s32.totalorder %s38, %s41
      %p47 = scmp.eq.s32.totalorder %s16, 0
      %p48 = por %p46, %p47
      %p49 = scmp.ne.s32.totalorder %s38, %s41
      %p50 = scmp.eq.s32.totalorder %s21, 8
      %p51 = por %p49, %p50
      %p52 = scmp.ne.s32.totalorder %s41, %s42
      %p53 = scmp.eq.s32.totalorder %s21, 0
      %p54 = por %p52, %p53
      %p55 = scmp.ne.s32.totalorder %s41, %s42
      %p56 = scmp.eq.s32.totalorder %s22, 8
      %p57 = por %p55, %p56
      %p59 = scmp.ne.s32.totalorder %s42, %s58
      %p60 = scmp.eq.s32.totalorder %s22, 0
      %p61 = por %p59, %p60
      %s63 = sadd.s32 %s62, 1
      %p66 = scmp.eq.s32.totalorder %s16, 8
      %p67 = scmp.ne.s32.totalorder %s62, %s64
      %p68 = scmp.eq.s32.totalorder %s16, 0
      %p69 = por %p67, %p68
      %p70 = scmp.ne.s32.totalorder %s62, %s64
      %p71 = scmp.eq.s32.totalorder %s21, 8
      %p72 = por %p70, %p71
      %p73 = scmp.ne.s32.totalorder %s64, %s65
      %p74 = scmp.eq.s32.totalorder %s21, 0
      %p75 = por %p73, %p74
      %p76 = scmp.ne.s32.totalorder %s64, %s65
      %p77 = scmp.eq.s32.totalorder %s22, 8
      %p78 = por %p76, %p77
      %p80 = scmp.ne.s32.totalorder %s65, %s79
      %p81 = scmp.eq.s32.totalorder %s22, 0
      %p82 = por %p80, %p81
      %s83 = ssub.s32 %s23, %s35
      %s84 = ssub.s32 %s24, %s31
      %s85 = sor.u32 %s83, %s84
      %p86 = scmp.eq.s32.totalorder %s85, 0
      %s88 = sadd.s32 %s87, 1
      %s89 = scalar_select %p86, %s87, %s88
      %p92 = pneg %p86
      %p93 = scmp.eq.s32.totalorder %s16, 8
      %p94 = por %p92, %p93
      %p95 = scmp.ne.s32.totalorder %s87, %s90
      %p96 = scmp.eq.s32.totalorder %s16, 0
      %p97 = por %p95, %p96
      %p98 = scmp.ne.s32.totalorder %s87, %s90
      %p99 = scmp.eq.s32.totalorder %s21, 8
      %p100 = por %p98, %p99
      %p101 = scmp.ne.s32.totalorder %s90, %s91
      %p102 = scmp.eq.s32.totalorder %s21, 0
      %p103 = por %p101, %p102
      %p104 = scmp.ne.s32.totalorder %s90, %s91
      %p105 = scmp.eq.s32.totalorder %s22, 8
      %p106 = por %p104, %p105
      %p108 = scmp.ne.s32.totalorder %s91, %s107
      %p109 = scmp.eq.s32.totalorder %s22, 0
      %p110 = por %p108, %p109
      %s111 = ssub.s32 %s23, %s35
      %p112 = scmp.eq.s32.totalorder %s111, 0
      %s114 = sadd.s32 %s113, 1
      %s115 = scalar_select %p112, %s113, %s114
      %p118 = pneg %p112
      %p119 = scmp.eq.s32.totalorder %s16, 8
      %p120 = por %p118, %p119
      %p121 = scmp.ne.s32.totalorder %s113, %s116
      %p122 = scmp.eq.s32.totalorder %s16, 0
      %p123 = por %p121, %p122
      %p124 = scmp.ne.s32.totalorder %s113, %s116
      %p125 = scmp.eq.s32.totalorder %s21, 8
      %p126 = por %p124, %p125
      %p127 = scmp.ne.s32.totalorder %s116, %s117
      %p128 = scmp.eq.s32.totalorder %s21, 0
      %p129 = por %p127, %p128
      %p130 = scmp.ne.s32.totalorder %s116, %s117
      %p131 = scmp.eq.s32.totalorder %s22, 8
      %p132 = por %p130, %p131
      %p134 = scmp.ne.s32.totalorder %s117, %s133
      %p135 = scmp.eq.s32.totalorder %s22, 0
      %p136 = por %p134, %p135
      %p137 = scmp.le.s32.totalorder 1, %s16
      %p138 = scmp.lt.s32.totalorder %s16, 10
      %p139 = pnand %p137, %p138
      %p140 = pneg %p139
      // Predicated region
      $region9: #{tpu_custom_call.1} parent=5 // pred_check
        _
      $region10: #{tpu_custom_call.1} parent=5 // pred_check_branch
        %142 = sbr.rel (%p139) target = $region12
      $region11: #{tpu_custom_call.1} parent=5 // pred_region
        %s143 = ssub.s32 %s16, 1
        // Predicated region
        $region13: #{tpu_custom_call.1} parent=11 // pred_check
          %p144 = pneg %p75
        $region14: #{tpu_custom_call.1} parent=11 // pred_check_branch
          %146 = sbr.rel (%p144) target = $region16
        $region15: #{tpu_custom_call.1} parent=11 // pred_region
          %148 = vsyncadd [#allocation7], 0
          %s149 = sshll.u32 %s1, 4
          %s150 = int_to_ptr.hbm [resolvable:$true] %s149
          %s151 = sshll.u32 [#allocation6], 4
          %s152 = int_to_ptr.vmem [resolvable:$true] %s151
          %157 = dma.hbm_to_vmem [thread:$0]  %s150, 2048, %s152, [#allocation7], 128, 128, 8
        $region16: #{tpu_custom_call.1} parent=11 // pred_fallthru
          _
      $region12: #{tpu_custom_call.1} parent=5 // pred_fallthru
        _
      %p158 = scmp.lt.s32.totalorder %s16, 9
      // Predicated region
      $region17: #{tpu_custom_call.1} parent=5 // pred_check
        %p159 = pneg %p158
      $region18: #{tpu_custom_call.1} parent=5 // pred_check_branch
        %161 = sbr.rel (%p159) target = $region20
      $region19: #{tpu_custom_call.1} parent=5 // pred_region
        // Predicated region
        $region21: #{tpu_custom_call.1} parent=19 // pred_check
          %p162 = pneg %p48
        $region22: #{tpu_custom_call.1} parent=19 // pred_check_branch
          %164 = sbr.rel (%p162) target = $region24
        $region23: #{tpu_custom_call.1} parent=19 // pred_region
          %s165 = sand.u32 %s16, 1
          %s166 = scalar_lea.sflag [#allocation4], %s165
          %s167 = sand.u32 %s38, 1
          %s168 = smul.addr %s167, 128
          %s169 = scalar_lea.vmem [#allocation3], %s168
          %s170 = smul.u32 16, %s24
          %172 = vsyncadd %s166, 0
          %s173 = smul.addr %s170, 8
          %s174 = scalar_lea.hbm %s0, %s173
          %s175 = sshll.u32 %s174, 4
          %s176 = int_to_ptr.hbm [resolvable:$true] %s175
          %s177 = sshll.u32 %s169, 4
          %s178 = int_to_ptr.vmem [resolvable:$true] %s177
          %183 = dma.hbm_to_vmem [thread:$0]  %s176, 2048, %s178, %s166, 128, 128, 8
        $region24: #{tpu_custom_call.1} parent=19 // pred_fallthru
          _
        // Predicated region
        $region25: #{tpu_custom_call.1} parent=19 // pred_check
          %p184 = pneg %p97
        $region26: #{tpu_custom_call.1} parent=19 // pred_check_branch
          %186 = sbr.rel (%p184) target = $region28
        $region27: #{tpu_custom_call.1} parent=19 // pred_region
          %s187 = sand.u32 %s16, 1
          %s188 = scalar_lea.sflag [#allocation4], %s187
          %s189 = sand.u32 %s87, 1
          %s190 = smul.addr %s189, 128
          %s191 = scalar_lea.vmem [#allocation8], %s190
          %s192 = smul.u32 16, %s23
          %194 = vsyncadd %s188, 0
          %s195 = smul.addr %s192, 3
          %s196 = sadd.s32 %s24, %s195
          %s197 = smul.addr %s196, 8
          %s198 = scalar_lea.hbm %s2, %s197
          %s199 = sshll.u32 %s198, 4
          %s200 = int_to_ptr.hbm [resolvable:$true] %s199
          %s201 = sshll.u32 %s191, 4
          %s202 = int_to_ptr.vmem [resolvable:$true] %s201
          %207 = dma.hbm_to_vmem [thread:$0]  %s200, 2048, %s202, %s188, 384, 128, 8
        $region28: #{tpu_custom_call.1} parent=19 // pred_fallthru
          _
      $region20: #{tpu_custom_call.1} parent=5 // pred_fallthru
        _
      %p208 = scmp.le.s32.totalorder 1, %s16
      %p209 = scmp.lt.s32.totalorder %s16, 10
      %p210 = pnand %p208, %p209
      %p211 = pneg %p210
      // Predicated region
      $region29: #{tpu_custom_call.1} parent=5 // pred_check
        _
      $region30: #{tpu_custom_call.1} parent=5 // pred_check_branch
        %213 = sbr.rel (%p210) target = $region32
      $region31: #{tpu_custom_call.1} parent=5 // pred_region
        %s214 = ssub.s32 %s16, 1
        %s215 = sand.u32 %s21, 1
        %s216 = scalar_lea.sflag [#allocation4], %s215
        %s217 = sand.u32 %s41, 1
        %s218 = smul.addr %s217, 128
        %s219 = scalar_lea.vmem [#allocation3], %s218
        // Predicated region
        $region33: #{tpu_custom_call.1} parent=31 // pred_check
          %p220 = pneg %p54
        $region34: #{tpu_custom_call.1} parent=31 // pred_check_branch
          %222 = sbr.rel (%p220) target = $region36
        $region35: #{tpu_custom_call.1} parent=31 // pred_region
          %224 = dma.done %s216, 2048
        $region36: #{tpu_custom_call.1} parent=31 // pred_fallthru
          _
        // Predicated region
        $region37: #{tpu_custom_call.1} parent=31 // pred_check
          %p225 = pneg %p75
        $region38: #{tpu_custom_call.1} parent=31 // pred_check_branch
          %227 = sbr.rel (%p225) target = $region40
        $region39: #{tpu_custom_call.1} parent=31 // pred_region
          %229 = dma.done [#allocation7], 2048
        $region40: #{tpu_custom_call.1} parent=31 // pred_fallthru
          _
        %s230 = sand.u32 %s21, 1
        %s231 = scalar_lea.sflag [#allocation4], %s230
        %s232 = sand.u32 %s90, 1
        %s233 = smul.addr %s232, 128
        %s234 = scalar_lea.vmem [#allocation8], %s233
        // Predicated region
        $region41: #{tpu_custom_call.1} parent=31 // pred_check
          %p235 = pneg %p103
        $region42: #{tpu_custom_call.1} parent=31 // pred_check_branch
          %237 = sbr.rel (%p235) target = $region44
        $region43: #{tpu_custom_call.1} parent=31 // pred_region
          %239 = dma.done %s231, 2048
        $region44: #{tpu_custom_call.1} parent=31 // pred_fallthru
          _
        %s240 = sand.u32 %s21, 1
        %s241 = scalar_lea.sflag [#allocation4], %s240
        %s242 = sand.u32 %s41, 1
        %s243 = smul.addr %s242, 128
        %s244 = scalar_lea.vmem [#allocation3], %s243
        %p245 = pneg %p54
        %p246 = pneg %p51
        %p247 = pneg %p75
        %p248 = pneg %p72
        %s249 = sand.u32 %s21, 1
        %s250 = scalar_lea.sflag [#allocation4], %s249
        %s251 = sand.u32 %s90, 1
        %s252 = smul.addr %s251, 128
        %s253 = scalar_lea.vmem [#allocation8], %s252
        %p254 = pneg %p103
        %p255 = pneg %p100
        %p256 = pneg %p129
        %p257 = pneg %p126
        %s258 = sand.u32 %s116, 1
        %s259 = scalar_lea.sflag [#allocation5], %s258
        %s260 = sand.u32 %s116, 1
        %s261 = smul.addr %s260, 128
        %s262 = scalar_lea.vmem [#allocation9], %s261
        %s263 = smul.u32 16, %s26
        %s264 = smul.u32 16, %s25
        %s265 = smul.u32 16, %s25
        %p266 = scmp.eq.s32.totalorder %s26, 0
        // Predicated region
        $region45: #{tpu_custom_call.1} parent=31 // pred_check
          %p267 = pneg %p266
        $region46: #{tpu_custom_call.1} parent=31 // pred_check_branch
          %269 = sbr.rel (%p267) target = $region48
        $region47: #{tpu_custom_call.1} parent=31 // pred_region
          %270 = vst [vmem:[#allocation2] sm:$0xff] 0.0
          %271 = vst [vmem:[#allocation2 + $0x8] sm:$0xff] 0.0
          %272 = vst [vmem:[#allocation2 + $0x10] sm:$0xff] 0.0
          %273 = vst [vmem:[#allocation2 + $0x18] sm:$0xff] 0.0
          %274 = vst [vmem:[#allocation2 + $0x20] sm:$0xff] 0.0
          %275 = vst [vmem:[#allocation2 + $0x28] sm:$0xff] 0.0
          %276 = vst [vmem:[#allocation2 + $0x30] sm:$0xff] 0.0
          %277 = vst [vmem:[#allocation2 + $0x38] sm:$0xff] 0.0
          %278 = vst [vmem:[#allocation2 + $0x40] sm:$0xff] 0.0
          %279 = vst [vmem:[#allocation2 + $0x48] sm:$0xff] 0.0
          %280 = vst [vmem:[#allocation2 + $0x50] sm:$0xff] 0.0
          %281 = vst [vmem:[#allocation2 + $0x58] sm:$0xff] 0.0
          %282 = vst [vmem:[#allocation2 + $0x60] sm:$0xff] 0.0
          %283 = vst [vmem:[#allocation2 + $0x68] sm:$0xff] 0.0
          %284 = vst [vmem:[#allocation2 + $0x70] sm:$0xff] 0.0
          %285 = vst [vmem:[#allocation2 + $0x78] sm:$0xff] 0.0
        $region48: #{tpu_custom_call.1} parent=31 // pred_fallthru
          _
        %v286 = vld [vmem:[#allocation2] sm:$0xff]
        %v287 = vld [vmem:[#allocation2 + $0x8] sm:$0xff]
        %v288 = vld [vmem:[#allocation2 + $0x10] sm:$0xff]
        %v289 = vld [vmem:[#allocation2 + $0x18] sm:$0xff]
        %v290 = vld [vmem:[#allocation2 + $0x20] sm:$0xff]
        %v291 = vld [vmem:[#allocation2 + $0x28] sm:$0xff]
        %v292 = vld [vmem:[#allocation2 + $0x30] sm:$0xff]
        %v293 = vld [vmem:[#allocation2 + $0x38] sm:$0xff]
        %v294 = vld [vmem:[#allocation2 + $0x40] sm:$0xff]
        %v295 = vld [vmem:[#allocation2 + $0x48] sm:$0xff]
        %v296 = vld [vmem:[#allocation2 + $0x50] sm:$0xff]
        %v297 = vld [vmem:[#allocation2 + $0x58] sm:$0xff]
        %v298 = vld [vmem:[#allocation2 + $0x60] sm:$0xff]
        %v299 = vld [vmem:[#allocation2 + $0x68] sm:$0xff]
        %v300 = vld [vmem:[#allocation2 + $0x70] sm:$0xff]
        %v301 = vld [vmem:[#allocation2 + $0x78] sm:$0xff]
        %v302 = vld [vmem:[%s234] sm:$0xff]
        %v303 = vld [vmem:[%s234 + $0x8] sm:$0xff]
        %v304 = vld [vmem:[%s234 + $0x10] sm:$0xff]
        %v305 = vld [vmem:[%s234 + $0x18] sm:$0xff]
        %v306 = vld [vmem:[%s234 + $0x20] sm:$0xff]
        %v307 = vld [vmem:[%s234 + $0x28] sm:$0xff]
        %v308 = vld [vmem:[%s234 + $0x30] sm:$0xff]
        %v309 = vld [vmem:[%s234 + $0x38] sm:$0xff]
        %v310 = vld [vmem:[%s234 + $0x40] sm:$0xff]
        %v311 = vld [vmem:[%s234 + $0x48] sm:$0xff]
        %v312 = vld [vmem:[%s234 + $0x50] sm:$0xff]
        %v313 = vld [vmem:[%s234 + $0x58] sm:$0xff]
        %v314 = vld [vmem:[%s234 + $0x60] sm:$0xff]
        %v315 = vld [vmem:[%s234 + $0x68] sm:$0xff]
        %v316 = vld [vmem:[%s234 + $0x70] sm:$0xff]
        %v317 = vld [vmem:[%s234 + $0x78] sm:$0xff]
        %v318 = vld [vmem:[%s219] sm:$0xff]
        %v319 = vld [vmem:[%s219 + $0x8] sm:$0xff]
        %v320 = vld [vmem:[%s219 + $0x10] sm:$0xff]
        %v321 = vld [vmem:[%s219 + $0x18] sm:$0xff]
        %v322 = vld [vmem:[%s219 + $0x20] sm:$0xff]
        %v323 = vld [vmem:[%s219 + $0x28] sm:$0xff]
        %v324 = vld [vmem:[%s219 + $0x30] sm:$0xff]
        %v325 = vld [vmem:[%s219 + $0x38] sm:$0xff]
        %v326 = vld [vmem:[%s219 + $0x40] sm:$0xff]
        %v327 = vld [vmem:[%s219 + $0x48] sm:$0xff]
        %v328 = vld [vmem:[%s219 + $0x50] sm:$0xff]
        %v329 = vld [vmem:[%s219 + $0x58] sm:$0xff]
        %v330 = vld [vmem:[%s219 + $0x60] sm:$0xff]
        %v331 = vld [vmem:[%s219 + $0x68] sm:$0xff]
        %v332 = vld [vmem:[%s219 + $0x70] sm:$0xff]
        %v333 = vld [vmem:[%s219 + $0x78] sm:$0xff]
        %334 = vmatpush.msra.mxu0 %v333
        %335 = vmatpush.msra.mxu0 %v332
        %336 = vmatpush.msra.mxu0 %v331
        %337 = vmatpush.msra.mxu0 %v330
        %338 = vmatpush.msra.mxu0 %v329
        %339 = vmatpush.msra.mxu0 %v328
        %340 = vmatpush.msra.mxu0 %v327
        %341 = vmatpush.msra.mxu0 %v326
        %342 = vmatpush.msra.mxu0 %v325
        %343 = vmatpush.msra.mxu0 %v324
        %344 = vmatpush.msra.mxu0 %v323
        %345 = vmatpush.msra.mxu0 %v322
        %346 = vmatpush.msra.mxu0 %v321
        %347 = vmatpush.msra.mxu0 %v320
        %348 = vmatpush.msra.mxu0 %v319
        %349 = vmatpush.msra.mxu0 %v318
        %350 = vmatmul.f32.gmra.mxu0 %v302
        %v351 = vpop.f32.mrf.mxu0
        %v352 = vadd.f32 0.0, %v351
        %353 = vmatmul.f32.gmra.mxu0 %v303
        %v354 = vpop.f32.mrf.mxu0
        %v355 = vadd.f32 0.0, %v354
        %356 = vmatmul.f32.gmra.mxu0 %v304
        %v357 = vpop.f32.mrf.mxu0
        %v358 = vadd.f32 0.0, %v357
        %359 = vmatmul.f32.gmra.mxu0 %v305
        %v360 = vpop.f32.mrf.mxu0
        %v361 = vadd.f32 0.0, %v360
        %362 = vmatmul.f32.gmra.mxu0 %v306
        %v363 = vpop.f32.mrf.mxu0
        %v364 = vadd.f32 0.0, %v363
        %365 = vmatmul.f32.gmra.mxu0 %v307
        %v366 = vpop.f32.mrf.mxu0
        %v367 = vadd.f32 0.0, %v366
        %368 = vmatmul.f32.gmra.mxu0 %v308
        %v369 = vpop.f32.mrf.mxu0
        %v370 = vadd.f32 0.0, %v369
        %371 = vmatmul.f32.gmra.mxu0 %v309
        %v372 = vpop.f32.mrf.mxu0
        %v373 = vadd.f32 0.0, %v372
        %374 = vmatmul.f32.gmra.mxu0 %v310
        %v375 = vpop.f32.mrf.mxu0
        %v376 = vadd.f32 0.0, %v375
        %377 = vmatmul.f32.gmra.mxu0 %v311
        %v378 = vpop.f32.mrf.mxu0
        %v379 = vadd.f32 0.0, %v378
        %380 = vmatmul.f32.gmra.mxu0 %v312
        %v381 = vpop.f32.mrf.mxu0
        %v382 = vadd.f32 0.0, %v381
        %383 = vmatmul.f32.gmra.mxu0 %v313
        %v384 = vpop.f32.mrf.mxu0
        %v385 = vadd.f32 0.0, %v384
        %386 = vmatmul.f32.gmra.mxu0 %v314
        %v387 = vpop.f32.mrf.mxu0
        %v388 = vadd.f32 0.0, %v387
        %389 = vmatmul.f32.gmra.mxu0 %v315
        %v390 = vpop.f32.mrf.mxu0
        %v391 = vadd.f32 0.0, %v390
        %392 = vmatmul.f32.gmra.mxu0 %v316
        %v393 = vpop.f32.mrf.mxu0
        %v394 = vadd.f32 0.0, %v393
        %395 = vmatmul.f32.gmra.mxu0 %v317
        %v396 = vpop.f32.mrf.mxu0
        %v397 = vadd.f32 0.0, %v396
        %398 = vdwg.mxu0
        %v399 = vadd.f32 %v286, %v352
        %v400 = vadd.f32 %v287, %v355
        %v401 = vadd.f32 %v288, %v358
        %v402 = vadd.f32 %v289, %v361
        %v403 = vadd.f32 %v290, %v364
        %v404 = vadd.f32 %v291, %v367
        %v405 = vadd.f32 %v292, %v370
        %v406 = vadd.f32 %v293, %v373
        %v407 = vadd.f32 %v294, %v376
        %v408 = vadd.f32 %v295, %v379
        %v409 = vadd.f32 %v296, %v382
        %v410 = vadd.f32 %v297, %v385
        %v411 = vadd.f32 %v298, %v388
        %v412 = vadd.f32 %v299, %v391
        %v413 = vadd.f32 %v300, %v394
        %v414 = vadd.f32 %v301, %v397
        %415 = vst [vmem:[#allocation2] sm:$0xff] %v399
        %416 = vst [vmem:[#allocation2 + $0x8] sm:$0xff] %v400
        %417 = vst [vmem:[#allocation2 + $0x10] sm:$0xff] %v401
        %418 = vst [vmem:[#allocation2 + $0x18] sm:$0xff] %v402
        %419 = vst [vmem:[#allocation2 + $0x20] sm:$0xff] %v403
        %420 = vst [vmem:[#allocation2 + $0x28] sm:$0xff] %v404
        %421 = vst [vmem:[#allocation2 + $0x30] sm:$0xff] %v405
        %422 = vst [vmem:[#allocation2 + $0x38] sm:$0xff] %v406
        %423 = vst [vmem:[#allocation2 + $0x40] sm:$0xff] %v407
        %424 = vst [vmem:[#allocation2 + $0x48] sm:$0xff] %v408
        %425 = vst [vmem:[#allocation2 + $0x50] sm:$0xff] %v409
        %426 = vst [vmem:[#allocation2 + $0x58] sm:$0xff] %v410
        %427 = vst [vmem:[#allocation2 + $0x60] sm:$0xff] %v411
        %428 = vst [vmem:[#allocation2 + $0x68] sm:$0xff] %v412
        %429 = vst [vmem:[#allocation2 + $0x70] sm:$0xff] %v413
        %430 = vst [vmem:[#allocation2 + $0x78] sm:$0xff] %v414
        %p431 = scmp.eq.s32.totalorder %s26, 2
        // Predicated region
        $region49: #{tpu_custom_call.1} parent=31 // pred_check
          %p432 = pneg %p431
        $region50: #{tpu_custom_call.1} parent=31 // pred_check_branch
          %434 = sbr.rel (%p432) target = $region52
        $region51: #{tpu_custom_call.1} parent=31 // pred_region
          %v435 = vld [vmem:[#allocation2] sm:$0xff]
          %v436 = vld [vmem:[#allocation2 + $0x8] sm:$0xff]
          %v437 = vld [vmem:[#allocation2 + $0x10] sm:$0xff]
          %v438 = vld [vmem:[#allocation2 + $0x18] sm:$0xff]
          %v439 = vld [vmem:[#allocation2 + $0x20] sm:$0xff]
          %v440 = vld [vmem:[#allocation2 + $0x28] sm:$0xff]
          %v441 = vld [vmem:[#allocation2 + $0x30] sm:$0xff]
          %v442 = vld [vmem:[#allocation2 + $0x38] sm:$0xff]
          %v443 = vld [vmem:[#allocation2 + $0x40] sm:$0xff]
          %v444 = vld [vmem:[#allocation2 + $0x48] sm:$0xff]
          %v445 = vld [vmem:[#allocation2 + $0x50] sm:$0xff]
          %v446 = vld [vmem:[#allocation2 + $0x58] sm:$0xff]
          %v447 = vld [vmem:[#allocation2 + $0x60] sm:$0xff]
          %v448 = vld [vmem:[#allocation2 + $0x68] sm:$0xff]
          %v449 = vld [vmem:[#allocation2 + $0x70] sm:$0xff]
          %v450 = vld [vmem:[#allocation2 + $0x78] sm:$0xff]
          %v451 = vld [vmem:[#allocation6] sm:$0xff]
          %v452 = vld [vmem:[#allocation6 + $0x8] sm:$0xff]
          %v453 = vld [vmem:[#allocation6 + $0x10] sm:$0xff]
          %v454 = vld [vmem:[#allocation6 + $0x18] sm:$0xff]
          %v455 = vld [vmem:[#allocation6 + $0x20] sm:$0xff]
          %v456 = vld [vmem:[#allocation6 + $0x28] sm:$0xff]
          %v457 = vld [vmem:[#allocation6 + $0x30] sm:$0xff]
          %v458 = vld [vmem:[#allocation6 + $0x38] sm:$0xff]
          %v459 = vld [vmem:[#allocation6 + $0x40] sm:$0xff]
          %v460 = vld [vmem:[#allocation6 + $0x48] sm:$0xff]
          %v461 = vld [vmem:[#allocation6 + $0x50] sm:$0xff]
          %v462 = vld [vmem:[#allocation6 + $0x58] sm:$0xff]
          %v463 = vld [vmem:[#allocation6 + $0x60] sm:$0xff]
          %v464 = vld [vmem:[#allocation6 + $0x68] sm:$0xff]
          %v465 = vld [vmem:[#allocation6 + $0x70] sm:$0xff]
          %v466 = vld [vmem:[#allocation6 + $0x78] sm:$0xff]
          %467 = vmatpush.msra.mxu0 %v466
          %468 = vmatpush.msra.mxu0 %v465
          %469 = vmatpush.msra.mxu0 %v464
          %470 = vmatpush.msra.mxu0 %v463
          %471 = vmatpush.msra.mxu0 %v462
          %472 = vmatpush.msra.mxu0 %v461
          %473 = vmatpush.msra.mxu0 %v460
          %474 = vmatpush.msra.mxu0 %v459
          %475 = vmatpush.msra.mxu0 %v458
          %476 = vmatpush.msra.mxu0 %v457
          %477 = vmatpush.msra.mxu0 %v456
          %478 = vmatpush.msra.mxu0 %v455
          %479 = vmatpush.msra.mxu0 %v454
          %480 = vmatpush.msra.mxu0 %v453
          %481 = vmatpush.msra.mxu0 %v452
          %482 = vmatpush.msra.mxu0 %v451
          %483 = vmatmul.f32.gmra.mxu0 %v435
          %v484 = vpop.f32.mrf.mxu0
          %v485 = vadd.f32 0.0, %v484
          %486 = vmatmul.f32.gmra.mxu0 %v436
          %v487 = vpop.f32.mrf.mxu0
          %v488 = vadd.f32 0.0, %v487
          %489 = vmatmul.f32.gmra.mxu0 %v437
          %v490 = vpop.f32.mrf.mxu0
          %v491 = vadd.f32 0.0, %v490
          %492 = vmatmul.f32.gmra.mxu0 %v438
          %v493 = vpop.f32.mrf.mxu0
          %v494 = vadd.f32 0.0, %v493
          %495 = vmatmul.f32.gmra.mxu0 %v439
          %v496 = vpop.f32.mrf.mxu0
          %v497 = vadd.f32 0.0, %v496
          %498 = vmatmul.f32.gmra.mxu0 %v440
          %v499 = vpop.f32.mrf.mxu0
          %v500 = vadd.f32 0.0, %v499
          %501 = vmatmul.f32.gmra.mxu0 %v441
          %v502 = vpop.f32.mrf.mxu0
          %v503 = vadd.f32 0.0, %v502
          %504 = vmatmul.f32.gmra.mxu0 %v442
          %v505 = vpop.f32.mrf.mxu0
          %v506 = vadd.f32 0.0, %v505
          %507 = vmatmul.f32.gmra.mxu0 %v443
          %v508 = vpop.f32.mrf.mxu0
          %v509 = vadd.f32 0.0, %v508
          %510 = vmatmul.f32.gmra.mxu0 %v444
          %v511 = vpop.f32.mrf.mxu0
          %v512 = vadd.f32 0.0, %v511
          %513 = vmatmul.f32.gmra.mxu0 %v445
          %v514 = vpop.f32.mrf.mxu0
          %v515 = vadd.f32 0.0, %v514
          %516 = vmatmul.f32.gmra.mxu0 %v446
          %v517 = vpop.f32.mrf.mxu0
          %v518 = vadd.f32 0.0, %v517
          %519 = vmatmul.f32.gmra.mxu0 %v447
          %v520 = vpop.f32.mrf.mxu0
          %v521 = vadd.f32 0.0, %v520
          %522 = vmatmul.f32.gmra.mxu0 %v448
          %v523 = vpop.f32.mrf.mxu0
          %v524 = vadd.f32 0.0, %v523
          %525 = vmatmul.f32.gmra.mxu0 %v449
          %v526 = vpop.f32.mrf.mxu0
          %v527 = vadd.f32 0.0, %v526
          %528 = vmatmul.f32.gmra.mxu0 %v450
          %v529 = vpop.f32.mrf.mxu0
          %v530 = vadd.f32 0.0, %v529
          %531 = vdwg.mxu0
          %532 = vst [vmem:[%s262] sm:$0xff] %v485
          %533 = vst [vmem:[%s262 + $0x8] sm:$0xff] %v488
          %534 = vst [vmem:[%s262 + $0x10] sm:$0xff] %v491
          %535 = vst [vmem:[%s262 + $0x18] sm:$0xff] %v494
          %536 = vst [vmem:[%s262 + $0x20] sm:$0xff] %v497
          %537 = vst [vmem:[%s262 + $0x28] sm:$0xff] %v500
          %538 = vst [vmem:[%s262 + $0x30] sm:$0xff] %v503
          %539 = vst [vmem:[%s262 + $0x38] sm:$0xff] %v506
          %540 = vst [vmem:[%s262 + $0x40] sm:$0xff] %v509
          %541 = vst [vmem:[%s262 + $0x48] sm:$0xff] %v512
          %542 = vst [vmem:[%s262 + $0x50] sm:$0xff] %v515
          %543 = vst [vmem:[%s262 + $0x58] sm:$0xff] %v518
          %544 = vst [vmem:[%s262 + $0x60] sm:$0xff] %v521
          %545 = vst [vmem:[%s262 + $0x68] sm:$0xff] %v524
          %546 = vst [vmem:[%s262 + $0x70] sm:$0xff] %v527
          %547 = vst [vmem:[%s262 + $0x78] sm:$0xff] %v530
        $region52: #{tpu_custom_call.1} parent=31 // pred_fallthru
          _
        %s548 = sand.u32 %s116, 1
        %s549 = scalar_lea.sflag [#allocation5], %s548
        %s550 = sand.u32 %s116, 1
        %s551 = smul.addr %s550, 128
        %s552 = scalar_lea.vmem [#allocation9], %s551
        // Predicated region
        $region53: #{tpu_custom_call.1} parent=31 // pred_check
          %p553 = pneg %p126
        $region54: #{tpu_custom_call.1} parent=31 // pred_check_branch
          %555 = sbr.rel (%p553) target = $region56
        $region55: #{tpu_custom_call.1} parent=31 // pred_region
          %s556 = smul.u32 16, %s25
          %558 = vsyncadd %s549, 0
          %s559 = smul.addr %s556, 8
          %s560 = scalar_lea.hbm %s3, %s559
          %s561 = sshll.u32 %s552, 4
          %s562 = int_to_ptr.vmem [resolvable:$true] %s561
          %s563 = sshll.u32 %s560, 4
          %s564 = int_to_ptr.hbm [resolvable:$true] %s563
          %569 = dma.vmem_to_hbm [thread:$0]  %s562, 2048, %s564, %s549, 128, 128, 8
        $region56: #{tpu_custom_call.1} parent=31 // pred_fallthru
          _
      $region32: #{tpu_custom_call.1} parent=5 // pred_fallthru
        _
      %p570 = scmp.le.s32.totalorder 2, %s16
      // Predicated region
      $region57: #{tpu_custom_call.1} parent=5 // pred_check
        %p571 = pneg %p570
      $region58: #{tpu_custom_call.1} parent=5 // pred_check_branch
        %573 = sbr.rel (%p571) target = $region60
      $region59: #{tpu_custom_call.1} parent=5 // pred_region
        %s574 = ssub.s32 %s16, 2
        // Predicated region
        $region61: #{tpu_custom_call.1} parent=59 // pred_check
          %p575 = pneg %p132
        $region62: #{tpu_custom_call.1} parent=59 // pred_check_branch
          %577 = sbr.rel (%p575) target = $region64
        $region63: #{tpu_custom_call.1} parent=59 // pred_region
          %s578 = sand.u32 %s117, 1
          %s579 = scalar_lea.sflag [#allocation5], %s578
          %s580 = sand.u32 %s117, 1
          %s581 = smul.addr %s580, 128
          %s582 = scalar_lea.vmem [#allocation9], %s581
          %584 = dma.done %s579, 2048
        $region64: #{tpu_custom_call.1} parent=59 // pred_fallthru
          _
      $region60: #{tpu_custom_call.1} parent=5 // pred_fallthru
        _
    $region6: #{tpu_custom_call.1} parent=1 // loop_footer
      %s20 = sadd.s32 1, %s16
    $region7: #{tpu_custom_call.1} parent=1 // loop_footer_branch
      %15 = sbr.rel target = $region3
    $region8: #{tpu_custom_call.1} parent=1 // loop_exit
      _
    %585 = vsyncpa [#allocation4], 1
    %s586 = scalar_lea.sflag [#allocation4], 1
    %587 = vsyncpa %s586, 1
    %588 = vsyncpa [#allocation7], 1
    %589 = vsyncpa [#allocation5], 1
    %s590 = scalar_lea.sflag [#allocation5], 1
    %591 = vsyncpa %s590, 1

</llo_original>
